<compile_context>
chip_gen: v6e
topology: v6e:2x2x1
jax: 0.10.0
libtpu: 0.0.40
codegen_flags: <defaults>
</compile_context>

<pallas_src>
import jax
import jax.numpy as jnp
from jax.experimental import pallas as pl
from jax.experimental.pallas import tpu as pltpu

BN_EPS = 1e-5


def _fc_kernel(x_ref,
               w1_ref, b1_ref,
               w2_ref, b2_ref,
               w3_ref, b3_ref, alpha_ref,
               o_ref):
    alpha = alpha_ref[0, 0]                     # SMEM scalar (PReLU shared alpha)
    b3 = b3_ref[0, 0]                           # SMEM scalar (fc3 bias)

    # x streamed as f32 straight from HBM; bf16 cast happens here (free on the
    # VPU) instead of as a standalone wrapper pass.
    x = x_ref[...].astype(jnp.bfloat16)         # (TB, 74)

    # ---- fc1 (+ folded bn1) + PReLU ---------------------------------------
    h = jnp.dot(x, w1_ref[...], preferred_element_type=jnp.float32) + b1_ref[...]
    h = jnp.where(h > 0, h, h * alpha)
    # dropout (eval) == identity

    # ---- fc2 (+ folded bn2) + PReLU ---------------------------------------
    h = jnp.dot(h.astype(jnp.bfloat16), w2_ref[...],
                preferred_element_type=jnp.float32) + b2_ref[...]
    h = jnp.where(h > 0, h, h * alpha)
    # dropout (eval) == identity

    # ---- fc3 (N=1) off the MXU: VPU mul + XLU cross-lane reduce, all f32 ---
    y = jnp.sum(h * w3_ref[...], axis=-1, keepdims=True) + b3      # (TB, 1)

    # ---- sigmoid: EUP exp + approx reciprocal (VALU stays free) ------------
    o_ref[...] = pl.reciprocal(1.0 + jnp.exp(-y), approx=True)


def _round_up(n, m):
    return ((n + m - 1) // m) * m


def _fold_bn(params):
    """Fold BatchNorm (running stats) + linear bias into the linear weights."""
    s1 = params["g1"] * jax.lax.rsqrt(params["v1"] + BN_EPS)
    w1p = params["w1"] * s1
    b1p = (params["b1"] - params["m1"]) * s1 + params["be1"]
    s2 = params["g2"] * jax.lax.rsqrt(params["v2"] + BN_EPS)
    w2p = params["w2"] * s2
    b2p = (params["b2"] - params["m2"]) * s2 + params["be2"]
    return w1p, b1p, w2p, b2p


def fc_forward(x, params, *, block_b=2048):
    """Inference-mode forward of the FC module as a batch-gridded Pallas kernel.

    block_b: max batch tile.  2048 keeps per-grid-step overhead (<~0.35 us)
    under a few percent of the per-tile MXU time while staying far below the
    scoped-VMEM limit on v5e/v6e/v7x.  The tile is additionally capped at
    ~B/2 (rounded to 8 sublanes) so the grid has >= 2 tiles and the batch axis
    can shard across both TensorCores on v7x.
    """
    B, F = x.shape
    assert F == 74, F

    # Trace-time constant folding on the tiny weight matrices.
    w1p, b1p, w2p, b2p = _fold_bn(params)
    w1p = w1p.astype(jnp.bfloat16)                      # (74, 128)  MXU rhs
    w2p = w2p.astype(jnp.bfloat16)                      # (128, 64)  MXU rhs
    w3r = params["w3"].reshape(1, 64).astype(jnp.float32)  # (1, 64) f32 VPU row
    b1p = b1p.astype(jnp.float32)                       # (1, 128)
    b2p = b2p.astype(jnp.float32)                       # (1, 64)
    b3 = params["b3"].reshape(1, 1).astype(jnp.float32)
    alpha = params["alpha"].reshape(1, 1).astype(jnp.float32)

    # Batch tile: multiple of 8 sublanes; no wrapper pad -- Pallas masks the
    # partial tail block (OOB output rows are dropped on writeback).
    tb = min(block_b, _round_up(pl.cdiv(B, 2), 8))
    grid = (pl.cdiv(B, tb),)

    smem_spec = pl.BlockSpec(memory_space=pltpu.MemorySpace.SMEM)

    cost = pl.CostEstimate(
        flops=2 * B * (74 * 128 + 128 * 64 + 64),
        transcendentals=B,
        bytes_accessed=B * (74 * 4 + 4)
        + (74 * 128 + 128 * 64) * 2
        + (128 + 64 + 64 + 2) * 4,
    )

    out = pl.pallas_call(
        _fc_kernel,
        out_shape=jax.ShapeDtypeStruct((B, 1), jnp.float32),
        grid=grid,
        in_specs=[
            pl.BlockSpec((tb, 74), lambda i: (i, 0)),     # x: streamed per tile (f32)
            pl.BlockSpec((74, 128), lambda i: (0, 0)),    # w1': resident in VMEM
            pl.BlockSpec((1, 128), lambda i: (0, 0)),     # b1'
            pl.BlockSpec((128, 64), lambda i: (0, 0)),    # w2'
            pl.BlockSpec((1, 64), lambda i: (0, 0)),      # b2'
            pl.BlockSpec((1, 64), lambda i: (0, 0)),      # w3 row (f32, VPU fc3)
            smem_spec,                                    # b3 (scalar)
            smem_spec,                                    # alpha (scalar)
        ],
        out_specs=pl.BlockSpec((tb, 1), lambda i: (i, 0)),
        compiler_params=pltpu.CompilerParams(
            dimension_semantics=("parallel",),
            vmem_limit_bytes=32 * 1024 * 1024),
        cost_estimate=cost,
    )(x, w1p, b1p, w2p, b2p, w3r, b3, alpha)
    return out


def init_params(key):
    """Deterministic init mirroring PyTorch defaults (uniform +/- 1/sqrt(fan_in))."""
    ks = jax.random.split(key, 6)

    def linear(kw, kb, fan_in, fan_out):
        bound = 1.0 / jnp.sqrt(fan_in)
        # store weight as (in, out) == torch weight.T
        w = jax.random.uniform(kw, (fan_in, fan_out), jnp.float32, -bound, bound)
        b = jax.random.uniform(kb, (1, fan_out), jnp.float32, -bound, bound)
        return w, b

    w1, b1 = linear(ks[0], ks[1], 74, 128)
    w2, b2 = linear(ks[2], ks[3], 128, 64)
    w3, b3 = linear(ks[4], ks[5], 64, 1)

    return dict(
        w1=w1, b1=b1,
        g1=jnp.ones((1, 128), jnp.float32), be1=jnp.zeros((1, 128), jnp.float32),
        m1=jnp.zeros((1, 128), jnp.float32), v1=jnp.ones((1, 128), jnp.float32),
        w2=w2, b2=b2,
        g2=jnp.ones((1, 64), jnp.float32), be2=jnp.zeros((1, 64), jnp.float32),
        m2=jnp.zeros((1, 64), jnp.float32), v2=jnp.ones((1, 64), jnp.float32),
        w3=w3, b3=b3,
        alpha=jnp.full((1, 1), 0.25, jnp.float32),  # PReLU init=0.25, num_parameters=1
    )


def _reference(x, p, *, bf16):
    """Pure-JAX reference.  bf16=True mimics the kernel's matmul precision
    (bf16 MXU inputs for fc1/fc2, f32 VPU fc3)."""
    w1p, b1p, w2p, b2p = _fold_bn(p)
    alpha = p["alpha"][0, 0]
    cast = (lambda a: a.astype(jnp.bfloat16)) if bf16 else (lambda a: a)
    h = jnp.dot(cast(x), cast(w1p), preferred_element_type=jnp.float32) + b1p
    h = jnp.where(h > 0, h, h * alpha)
    h = jnp.dot(cast(h), cast(w2p), preferred_element_type=jnp.float32) + b2p
    h = jnp.where(h > 0, h, h * alpha)
    h = jnp.sum(h * p["w3"].T, axis=-1, keepdims=True) + p["b3"]   # fc3 in f32
    return jax.nn.sigmoid(h)


if __name__ == "__main__":
    key = jax.random.PRNGKey(0)
    k_x, k_p = jax.random.split(key)
    params = init_params(k_p)

    # Small shape consistent with the module: (batch, 74) features.
    B = 8
    x = jax.random.normal(k_x, (B, 74), jnp.float32)
    out = fc_forward(x, params)
    jax.block_until_ready(out)
    assert out.shape == (B, 1), out.shape

    ref_bf16 = _reference(x, params, bf16=True)      # same precision path
    assert jnp.allclose(out, ref_bf16, atol=2e-3, rtol=0), (out, ref_bf16)
    ref_f32 = _reference(x, params, bf16=False)      # full-f32 PyTorch semantics
    assert jnp.allclose(out, ref_f32, atol=5e-2, rtol=0), (out, ref_f32)

    # Exercise multiple grid steps and the unpadded partial tail block
    # (grid=(3,), last block overhangs B; OOB output rows are dropped).
    B2 = 300
    x2 = jax.random.normal(k_x, (B2, 74), jnp.float32)
    out2 = fc_forward(x2, params, block_b=128)
    jax.block_until_ready(out2)
    assert out2.shape == (B2, 1), out2.shape
    ref2 = _reference(x2, params, bf16=True)
    assert jnp.allclose(out2, ref2, atol=2e-3, rtol=0), (out2, ref2)

    # Default tile-size path (tb capped at ~B/2 for >=2 tiles on v7x megacore).
    out3 = fc_forward(x2, params)
    jax.block_until_ready(out3)
    assert out3.shape == (B2, 1), out3.shape
    assert jnp.allclose(out3, ref2, atol=2e-3, rtol=0), (out3, ref2)

    print("KERNEL_OK")
</pallas_src>

<mosaic_0001>
module attributes {stable_mosaic.version = 11 : i64} {
  func.func @_fc_kernel(%arg0: i32, %arg1: memref<8x74xf32, #tpu.memory_space<vmem>>, %arg2: memref<74x128xbf16, #tpu.memory_space<vmem>>, %arg3: memref<1x128xf32, #tpu.memory_space<vmem>>, %arg4: memref<128x64xbf16, #tpu.memory_space<vmem>>, %arg5: memref<1x64xf32, #tpu.memory_space<vmem>>, %arg6: memref<1x64xf32, #tpu.memory_space<vmem>>, %arg7: memref<1x1xf32, #tpu.memory_space<smem>>, %arg8: memref<1x1xf32, #tpu.memory_space<smem>>, %arg9: memref<8x1xf32, #tpu.memory_space<vmem>>) attributes {dimension_semantics = [#tpu.dimension_semantics<parallel>], iteration_bounds = array<i64: 1>, scalar_prefetch = 0 : i64, scratch_operands = 0 : i64, tpu.core_type = #tpu.core_type<tc>, window_params = [{transform_indices = @transform_0, window_bounds = array<i64: 8, 74>}, {pipeline_mode = #tpu.pipeline_mode<synchronous>, transform_indices = @transform_1, window_bounds = array<i64: 74, 128>}, {pipeline_mode = #tpu.pipeline_mode<synchronous>, transform_indices = @transform_2, window_bounds = array<i64: 1, 128>}, {pipeline_mode = #tpu.pipeline_mode<synchronous>, transform_indices = @transform_3, window_bounds = array<i64: 128, 64>}, {pipeline_mode = #tpu.pipeline_mode<synchronous>, transform_indices = @transform_4, window_bounds = array<i64: 1, 64>}, {pipeline_mode = #tpu.pipeline_mode<synchronous>, transform_indices = @transform_5, window_bounds = array<i64: 1, 64>}, {transform_indices = @transform_6, window_bounds = array<i64: 1, 1>}, {transform_indices = @transform_7, window_bounds = array<i64: 1, 1>}, {transform_indices = @transform_8, window_bounds = array<i64: 8, 1>}]} {
    %c0 = arith.constant 0 : index
    %c0_0 = arith.constant 0 : index
    %0 = memref.load %arg8[%c0, %c0_0] : memref<1x1xf32, #tpu.memory_space<smem>>
    %c0_1 = arith.constant 0 : index
    %c0_2 = arith.constant 0 : index
    %1 = memref.load %arg7[%c0_1, %c0_2] : memref<1x1xf32, #tpu.memory_space<smem>>
    %c0_3 = arith.constant 0 : index
    %c0_4 = arith.constant 0 : index
    %2 = vector.load %arg1[%c0_3, %c0_4] : memref<8x74xf32, #tpu.memory_space<vmem>>, vector<8x74xf32>
    %3 = arith.truncf %2 : vector<8x74xf32> to vector<8x74xbf16>
    %c0_5 = arith.constant 0 : index
    %c0_6 = arith.constant 0 : index
    %4 = vector.load %arg2[%c0_5, %c0_6] : memref<74x128xbf16, #tpu.memory_space<vmem>>, vector<74x128xbf16>
    %cst = arith.constant dense<0.000000e+00> : vector<8x128xf32>
    %5 = tpu.matmul %3, %4, %cst {dimension_numbers = #tpu.dot_dimension_numbers<[1], [0], [0], [1], [0, 0, 1, 1], [], []>} : vector<8x74xbf16>, vector<74x128xbf16>, vector<8x128xf32> -> vector<8x128xf32>
    %c0_7 = arith.constant 0 : index
    %c0_8 = arith.constant 0 : index
    %6 = vector.load %arg3[%c0_7, %c0_8] : memref<1x128xf32, #tpu.memory_space<vmem>>, vector<1x128xf32>
    %7 = vector.broadcast %6 : vector<1x128xf32> to vector<8x128xf32>
    %8 = arith.addf %5, %7 : vector<8x128xf32>
    %cst_9 = arith.constant 0.000000e+00 : f32
    %9 = vector.broadcast %cst_9 : f32 to vector<8x128xf32>
    %10 = arith.cmpf ogt, %8, %9 : vector<8x128xf32>
    %11 = vector.broadcast %0 : f32 to vector<8x128xf32>
    %12 = arith.mulf %8, %11 : vector<8x128xf32>
    %13 = arith.select %10, %8, %12 : vector<8x128xi1>, vector<8x128xf32>
    %14 = arith.truncf %13 : vector<8x128xf32> to vector<8x128xbf16>
    %c0_10 = arith.constant 0 : index
    %c0_11 = arith.constant 0 : index
    %15 = vector.load %arg4[%c0_10, %c0_11] : memref<128x64xbf16, #tpu.memory_space<vmem>>, vector<128x64xbf16>
    %cst_12 = arith.constant dense<0.000000e+00> : vector<8x64xf32>
    %16 = tpu.matmul %14, %15, %cst_12 {dimension_numbers = #tpu.dot_dimension_numbers<[1], [0], [0], [1], [0, 0, 1, 1], [], []>} : vector<8x128xbf16>, vector<128x64xbf16>, vector<8x64xf32> -> vector<8x64xf32>
    %c0_13 = arith.constant 0 : index
    %c0_14 = arith.constant 0 : index
    %17 = vector.load %arg5[%c0_13, %c0_14] : memref<1x64xf32, #tpu.memory_space<vmem>>, vector<1x64xf32>
    %18 = vector.broadcast %17 : vector<1x64xf32> to vector<8x64xf32>
    %19 = arith.addf %16, %18 : vector<8x64xf32>
    %cst_15 = arith.constant 0.000000e+00 : f32
    %20 = vector.broadcast %cst_15 : f32 to vector<8x64xf32>
    %21 = arith.cmpf ogt, %19, %20 : vector<8x64xf32>
    %22 = vector.broadcast %0 : f32 to vector<8x64xf32>
    %23 = arith.mulf %19, %22 : vector<8x64xf32>
    %24 = arith.select %21, %19, %23 : vector<8x64xi1>, vector<8x64xf32>
    %c0_16 = arith.constant 0 : index
    %c0_17 = arith.constant 0 : index
    %25 = vector.load %arg6[%c0_16, %c0_17] : memref<1x64xf32, #tpu.memory_space<vmem>>, vector<1x64xf32>
    %26 = vector.broadcast %25 : vector<1x64xf32> to vector<8x64xf32>
    %27 = arith.mulf %24, %26 : vector<8x64xf32>
    %cst_18 = arith.constant dense<0.000000e+00> : vector<8xf32>
    %28 = vector.multi_reduction <add>, %27, %cst_18 [1] : vector<8x64xf32> to vector<8xf32>
    %29 = vector.shape_cast %28 : vector<8xf32> to vector<8x1xf32>
    %30 = vector.broadcast %1 : f32 to vector<8x1xf32>
    %31 = arith.addf %29, %30 : vector<8x1xf32>
    %cst_19 = arith.constant 0.000000e+00 : f32
    %32 = vector.broadcast %cst_19 : f32 to vector<8x1xf32>
    %33 = arith.subf %32, %31 : vector<8x1xf32>
    %34 = math.exp %33 : vector<8x1xf32>
    %cst_20 = arith.constant 1.000000e+00 : f32
    %35 = vector.broadcast %cst_20 : f32 to vector<8x1xf32>
    %36 = arith.addf %35, %34 : vector<8x1xf32>
    %37 = tpu.reciprocal %36 {approx = true} : vector<8x1xf32> -> vector<8x1xf32>
    %c0_21 = arith.constant 0 : index
    %c0_22 = arith.constant 0 : index
    %38 = vector.load %arg9[%c0_21, %c0_22] : memref<8x1xf32, #tpu.memory_space<vmem>>, vector<8x1xf32>
    tpu.vector_store %arg9[%c0_21, %c0_22], %37 {strides = array<i32>} : memref<8x1xf32, #tpu.memory_space<vmem>>, vector<8x1xf32>,
    return
  }
  func.func @transform_0(%arg0: i32) -> (i32, i32) {
    %c0_i32 = arith.constant 0 : i32
    %c0_i32_0 = arith.constant 0 : i32
    return %arg0, %c0_i32 : i32, i32
  }
  func.func @transform_1(%arg0: i32) -> (i32, i32) {
    %c0_i32 = arith.constant 0 : i32
    %c0_i32_0 = arith.constant 0 : i32
    %c0_i32_1 = arith.constant 0 : i32
    return %c0_i32, %c0_i32_0 : i32, i32
  }
  func.func @transform_2(%arg0: i32) -> (i32, i32) {
    %c0_i32 = arith.constant 0 : i32
    %c0_i32_0 = arith.constant 0 : i32
    %c0_i32_1 = arith.constant 0 : i32
    return %c0_i32, %c0_i32_0 : i32, i32
  }
  func.func @transform_3(%arg0: i32) -> (i32, i32) {
    %c0_i32 = arith.constant 0 : i32
    %c0_i32_0 = arith.constant 0 : i32
    %c0_i32_1 = arith.constant 0 : i32
    return %c0_i32, %c0_i32_0 : i32, i32
  }
  func.func @transform_4(%arg0: i32) -> (i32, i32) {
    %c0_i32 = arith.constant 0 : i32
    %c0_i32_0 = arith.constant 0 : i32
    %c0_i32_1 = arith.constant 0 : i32
    return %c0_i32, %c0_i32_0 : i32, i32
  }
  func.func @transform_5(%arg0: i32) -> (i32, i32) {
    %c0_i32 = arith.constant 0 : i32
    %c0_i32_0 = arith.constant 0 : i32
    %c0_i32_1 = arith.constant 0 : i32
    return %c0_i32, %c0_i32_0 : i32, i32
  }
  func.func @transform_6(%arg0: i32) -> (i32, i32) {
    %c0_i32 = arith.constant 0 : i32
    %c0_i32_0 = arith.constant 0 : i32
    %c0_i32_1 = arith.constant 0 : i32
    return %c0_i32, %c0_i32_0 : i32, i32
  }
  func.func @transform_7(%arg0: i32) -> (i32, i32) {
    %c0_i32 = arith.constant 0 : i32
    %c0_i32_0 = arith.constant 0 : i32
    %c0_i32_1 = arith.constant 0 : i32
    return %c0_i32, %c0_i32_0 : i32, i32
  }
  func.func @transform_8(%arg0: i32) -> (i32, i32) {
    %c0_i32 = arith.constant 0 : i32
    %c0_i32_0 = arith.constant 0 : i32
    return %arg0, %c0_i32 : i32, i32
  }
}

</mosaic_0001>

<llo_original>
// kernel: tpu_custom_call.1
$region0: #{tpu_custom_call.1}
  #allocation0 [shape = 'u32[]', space=smem, size = 0x4, offset = 0x4, fixed_abs, tag = 'smem constant byte address 0x4 - core index']
  #allocation1 [shape = 'u32[144,128]{1,0:T(1,128)}', space=vmem, size = 0x12000, scoped, tag = 'internal scratch']
  #allocation2 [shape = 'f32[1,1]{1,0:T(1,128)S(6)}', space=smem, size = 0x200, scoped, tag = 'scoped memory for tpu_custom_call.1']
  #allocation3 [shape = 'f32[1,1]{1,0:T(1,128)S(6)}', space=smem, size = 0x200, scoped, tag = 'scoped memory for tpu_custom_call.1']
  %s0 = inlined_call_operand.vmem [shape: f32[8,74], index: 0, kind: input, shape index: {}]
  %s1 = inlined_call_operand.vmem [shape: bf16[74,128], index: 1, kind: input, shape index: {}]
  %s2 = inlined_call_operand.vmem [shape: f32[1,128], index: 2, kind: input, shape index: {}]
  %s3 = inlined_call_operand.vmem [shape: bf16[128,64], index: 3, kind: input, shape index: {}]
  %s4 = inlined_call_operand.vmem [shape: f32[1,64], index: 4, kind: input, shape index: {}]
  %s5 = inlined_call_operand.vmem [shape: f32[1,64], index: 5, kind: input, shape index: {}]
  %s6 = inlined_call_operand.<no memory space> [shape: f32[1,1], index: 6, kind: input, shape index: {}]
  %s7 = inlined_call_operand.<no memory space> [shape: f32[1,1], index: 7, kind: input, shape index: {}]
  %s8 = inlined_call_operand.vmem [shape: f32[8,1], index: 8, kind: output, shape index: {}]
  %s9 = sld [smem:[#allocation0]]
  $region42: #{tpu_custom_call.1} parent=0
    _
  %s11 = ssub.s32 1, %s9
  %s12 = scalar_select 0, %s11, %s9
  %13 = sst [smem:[#allocation2]] %s6
  %14 = sst [smem:[#allocation3]] %s7
  // Predicated region
  $region2: #{tpu_custom_call.1} parent=0 // pred_check
    _
  $region3: #{tpu_custom_call.1} parent=0 // pred_check_branch
    %16 = sbr.rel (0) target = $region5
  $region4: #{tpu_custom_call.1} parent=0 // pred_region
    _
  $region5: #{tpu_custom_call.1} parent=0 // pred_fallthru
    _
  // Predicated region
  $region6: #{tpu_custom_call.1} parent=0 // pred_check
    _
  $region7: #{tpu_custom_call.1} parent=0 // pred_check_branch
    %18 = sbr.rel (0) target = $region9
  $region8: #{tpu_custom_call.1} parent=0 // pred_region
    _
  $region9: #{tpu_custom_call.1} parent=0 // pred_fallthru
    _
  // Predicated region
  $region10: #{tpu_custom_call.1} parent=0 // pred_check
    _
  $region11: #{tpu_custom_call.1} parent=0 // pred_check_branch
    %20 = sbr.rel (0) target = $region13
  $region12: #{tpu_custom_call.1} parent=0 // pred_region
    _
  $region13: #{tpu_custom_call.1} parent=0 // pred_fallthru
    _
  // Predicated region
  $region14: #{tpu_custom_call.1} parent=0 // pred_check
    _
  $region15: #{tpu_custom_call.1} parent=0 // pred_check_branch
    %22 = sbr.rel (0) target = $region17
  $region16: #{tpu_custom_call.1} parent=0 // pred_region
    _
  $region17: #{tpu_custom_call.1} parent=0 // pred_fallthru
    _
  // Predicated region
  $region18: #{tpu_custom_call.1} parent=0 // pred_check
    _
  $region19: #{tpu_custom_call.1} parent=0 // pred_check_branch
    %24 = sbr.rel (0) target = $region21
  $region20: #{tpu_custom_call.1} parent=0 // pred_region
    _
  $region21: #{tpu_custom_call.1} parent=0 // pred_fallthru
    _
  // Predicated region
  $region22: #{tpu_custom_call.1} parent=0 // pred_check
    _
  $region23: #{tpu_custom_call.1} parent=0 // pred_check_branch
    %26 = sbr.rel (0) target = $region25
  $region24: #{tpu_custom_call.1} parent=0 // pred_region
    _
  $region25: #{tpu_custom_call.1} parent=0 // pred_fallthru
    _
  // Predicated region
  $region26: #{tpu_custom_call.1} parent=0 // pred_check
    _
  $region27: #{tpu_custom_call.1} parent=0 // pred_check_branch
    %28 = sbr.rel (0) target = $region29
  $region28: #{tpu_custom_call.1} parent=0 // pred_region
    _
  $region29: #{tpu_custom_call.1} parent=0 // pred_fallthru
    _
  // Predicated region
  $region30: #{tpu_custom_call.1} parent=0 // pred_check
    _
  $region31: #{tpu_custom_call.1} parent=0 // pred_check_branch
    %30 = sbr.rel (0) target = $region33
  $region32: #{tpu_custom_call.1} parent=0 // pred_region
    _
  $region33: #{tpu_custom_call.1} parent=0 // pred_fallthru
    _
  %s32 = sld [smem:[#allocation3]]
  %s33 = sld [smem:[#allocation2]]
  %v34 = vld [vmem:[%s0] sm:$0xff]
  %v35 = vpack.c.bf16 %v34, %v34
  %v36 = vld [vmem:[%s1] sm:$0xf]
  %v37 = vld [vmem:[%s1 + $0x4] sm:$0xf]
  %v38 = vld [vmem:[%s1 + $0x8] sm:$0xf]
  %v39 = vld [vmem:[%s1 + $0xc] sm:$0xf]
  %v40 = vld [vmem:[%s1 + $0x10] sm:$0xf]
  %v41 = vld [vmem:[%s1 + $0x14] sm:$0xf]
  %v42 = vld [vmem:[%s1 + $0x18] sm:$0xf]
  %v43 = vld [vmem:[%s1 + $0x1c] sm:$0xf]
  %v44 = vld [vmem:[%s1 + $0x20] sm:$0xf]
  %v45 = vld [vmem:[%s1 + $0x24] sm:$0x1]
  %v46 = vld [vmem:[%s2] sm:$0x1]
  %v48 = vlaneseq
  %v49 = vshrl.u32 %v48, 7
  %v50 = vsub.s32 0, %v49
  %v51 = vrot.slane %v46, %v50
  %v63 = vunpack.c.l.b16 %v36
  %v64 = vunpack.c.l.b16 %v37
  %v65 = vunpack.c.l.b16 %v38
  %v66 = vunpack.c.l.b16 %v39
  %v67 = vunpack.c.l.b16 %v40
  %v68 = vunpack.c.l.b16 %v41
  %v69 = vunpack.c.l.b16 %v42
  %v70 = vunpack.c.l.b16 %v43
  %v71 = vunpack.c.l.b16 %v44
  %v72 = vunpack.c.l.b16 %v45
  %v73 = vpack.c.b16 %v64, %v63
  %v74 = vpack.c.b16 %v66, %v65
  %v75 = vpack.c.b16 %v68, %v67
  %v76 = vpack.c.b16 %v70, %v69
  %v77 = vpack.c.b16 %v72, %v71
  %vm82 = vcmask 605184
  %v84 = vsel %vm82, %v35, 0
  %vm86 = vcmask 1044480
  %v88 = vsel %vm86, %v77, 0
  %90 = vmatprep.subr.bf16.mxu0 0
  %91 = vmatpush1.bf16.msra.mxu0 0
  %92 = vmatprep.subr.bf16.mxu0 0
  %93 = vmatpush1.bf16.msra.mxu0 0
  %94 = vmatprep.subr.bf16.mxu0 0
  %95 = vmatpush1.bf16.msra.mxu0 0
  %96 = vmatprep.subr.bf16.mxu0 0
  %97 = vmatpush1.bf16.msra.mxu0 %v88
  %98 = vmatprep.subr.bf16.mxu0 0
  %99 = vmatpush1.bf16.msra.mxu0 %v76
  %100 = vmatprep.subr.bf16.mxu0 0
  %101 = vmatpush1.bf16.msra.mxu0 %v75
  %102 = vmatprep.subr.bf16.mxu0 0
  %103 = vmatpush1.bf16.msra.mxu0 %v74
  %104 = vmatprep.subr.bf16.mxu0 0
  %105 = vmatpush1.bf16.msra.mxu0 %v73
  %106 = vmatprep.subr.bf16.mxu0 0
  %107 = vmatpush2.bf16.msra.mxu0 0
  %108 = vmatprep.subr.bf16.mxu0 0
  %109 = vmatpush2.bf16.msra.mxu0 0
  %110 = vmatprep.subr.bf16.mxu0 0
  %111 = vmatpush2.bf16.msra.mxu0 0
  %112 = vmatprep.subr.bf16.mxu0 0
  %113 = vmatpush2.bf16.msra.mxu0 0
  %114 = vmatprep.subr.bf16.mxu0 0
  %115 = vmatpush2.bf16.msra.mxu0 0
  %116 = vmatprep.subr.bf16.mxu0 0
  %117 = vmatpush2.bf16.msra.mxu0 0
  %118 = vmatprep.subr.bf16.mxu0 0
  %119 = vmatpush2.bf16.msra.mxu0 0
  %120 = vmatprep.subr.bf16.mxu0 0
  %121 = vmatpush2.bf16.msra.mxu0 0
  %122 = vmatprep.mubr.bf16.mxu0 0
  %123 = vmatmul.mubr.bf16.gmra.mxu0 %v84
  %v124 = vpop.f32.mrf.mxu0
  %v125 = vadd.f32 %v51, %v124
  %v126 = vpop.f32.mrf.mxu0
  %v127 = vpop.f32.mrf.mxu0
  %v128 = vpop.f32.mrf.mxu0
  %129 = vdwg.mxu0
  %vm130 = vcmp.gt.f32.partialorder %v125, 0.0
  %v131 = vstv %s32
  %v132 = vmul.f32 %v125, %v131
  %v133 = vsel %vm130, %v125, %v132
  %v134 = vpack.c.bf16 %v133, %v133
  %v135 = vld [vmem:[%s3] sm:$0xf]
  %v136 = vld [vmem:[%s3 + $0x4] sm:$0xf]
  %v137 = vld [vmem:[%s3 + $0x8] sm:$0xf]
  %v138 = vld [vmem:[%s3 + $0xc] sm:$0xf]
  %v139 = vld [vmem:[%s3 + $0x10] sm:$0xf]
  %v140 = vld [vmem:[%s3 + $0x14] sm:$0xf]
  %v141 = vld [vmem:[%s3 + $0x18] sm:$0xf]
  %v142 = vld [vmem:[%s3 + $0x1c] sm:$0xf]
  %v143 = vld [vmem:[%s3 + $0x20] sm:$0xf]
  %v144 = vld [vmem:[%s3 + $0x24] sm:$0xf]
  %v145 = vld [vmem:[%s3 + $0x28] sm:$0xf]
  %v146 = vld [vmem:[%s3 + $0x2c] sm:$0xf]
  %v147 = vld [vmem:[%s3 + $0x30] sm:$0xf]
  %v148 = vld [vmem:[%s3 + $0x34] sm:$0xf]
  %v149 = vld [vmem:[%s3 + $0x38] sm:$0xf]
  %v150 = vld [vmem:[%s3 + $0x3c] sm:$0xf]
  %v151 = vld [vmem:[%s4] sm:$0x1]
  %v153 = vlaneseq
  %v154 = vshrl.u32 %v153, 7
  %v155 = vsub.s32 0, %v154
  %v156 = vrot.slane %v151, %v155
  %v174 = vunpack.c.l.b16 %v135
  %v175 = vunpack.c.l.b16 %v136
  %v176 = vunpack.c.l.b16 %v137
  %v177 = vunpack.c.l.b16 %v138
  %v178 = vunpack.c.l.b16 %v139
  %v179 = vunpack.c.l.b16 %v140
  %v180 = vunpack.c.l.b16 %v141
  %v181 = vunpack.c.l.b16 %v142
  %v182 = vunpack.c.l.b16 %v143
  %v183 = vunpack.c.l.b16 %v144
  %v184 = vunpack.c.l.b16 %v145
  %v185 = vunpack.c.l.b16 %v146
  %v186 = vunpack.c.l.b16 %v147
  %v187 = vunpack.c.l.b16 %v148
  %v188 = vunpack.c.l.b16 %v149
  %v189 = vunpack.c.l.b16 %v150
  %v190 = vpack.c.b16 %v175, %v174
  %v191 = vpack.c.b16 %v177, %v176
  %v192 = vpack.c.b16 %v179, %v178
  %v193 = vpack.c.b16 %v181, %v180
  %v194 = vpack.c.b16 %v183, %v182
  %v195 = vpack.c.b16 %v185, %v184
  %v196 = vpack.c.b16 %v187, %v186
  %v197 = vpack.c.b16 %v189, %v188
  %206 = vmatprep.subr.bf16.mxu0 0
  %207 = vmatpush1.bf16.msra.mxu0 %v197
  %208 = vmatprep.subr.bf16.mxu0 0
  %209 = vmatpush1.bf16.msra.mxu0 %v196
  %210 = vmatprep.subr.bf16.mxu0 0
  %211 = vmatpush1.bf16.msra.mxu0 %v195
  %212 = vmatprep.subr.bf16.mxu0 0
  %213 = vmatpush1.bf16.msra.mxu0 %v194
  %214 = vmatprep.subr.bf16.mxu0 0
  %215 = vmatpush1.bf16.msra.mxu0 %v193
  %216 = vmatprep.subr.bf16.mxu0 0
  %217 = vmatpush1.bf16.msra.mxu0 %v192
  %218 = vmatprep.subr.bf16.mxu0 0
  %219 = vmatpush1.bf16.msra.mxu0 %v191
  %220 = vmatprep.subr.bf16.mxu0 0
  %221 = vmatpush1.bf16.msra.mxu0 %v190
  %222 = vmatprep.subr.bf16.mxu0 0
  %223 = vmatpush2.bf16.msra.mxu0 0
  %224 = vmatprep.subr.bf16.mxu0 0
  %225 = vmatpush2.bf16.msra.mxu0 0
  %226 = vmatprep.subr.bf16.mxu0 0
  %227 = vmatpush2.bf16.msra.mxu0 0
  %228 = vmatprep.subr.bf16.mxu0 0
  %229 = vmatpush2.bf16.msra.mxu0 0
  %230 = vmatprep.subr.bf16.mxu0 0
  %231 = vmatpush2.bf16.msra.mxu0 0
  %232 = vmatprep.subr.bf16.mxu0 0
  %233 = vmatpush2.bf16.msra.mxu0 0
  %234 = vmatprep.subr.bf16.mxu0 0
  %235 = vmatpush2.bf16.msra.mxu0 0
  %236 = vmatprep.subr.bf16.mxu0 0
  %237 = vmatpush2.bf16.msra.mxu0 0
  %238 = vmatprep.mubr.bf16.mxu0 0
  %239 = vmatmul.mubr.bf16.gmra.mxu0 %v134
  %v240 = vpop.f32.mrf.mxu0
  %v241 = vadd.f32 %v156, %v240
  %v242 = vpop.f32.mrf.mxu0
  %v243 = vpop.f32.mrf.mxu0
  %v244 = vpop.f32.mrf.mxu0
  %245 = vdwg.mxu0
  %vm246 = vcmp.gt.f32.partialorder %v241, 0.0
  %v247 = vmul.f32 %v241, %v131
  %v248 = vsel %vm246, %v241, %v247
  %v249 = vld [vmem:[%s5] sm:$0x1]
  %v251 = vlaneseq
  %v252 = vshrl.u32 %v251, 7
  %v253 = vsub.s32 0, %v252
  %v254 = vrot.slane %v249, %v253
  %v256 = vmul.f32 %v248, %v254
  %vm257 = vcmask 523264
  %v258 = vsel %vm257, %v256, 0.0
  %259 = vadd.xlane.f32.xlu0 %v258
  %v260 = vpop.xlane.xlu0 %259
  %v261 = vstv %s33
  %v262 = vadd.f32 %v260, %v261
  %v263 = vsub.f32 0.0, %v262
  %v264 = vmul.f32 %v263, 1.442695
  %v265 = vpow.pop %v264
  %v266 = vadd.f32 %v265, 1.0
  %v267 = vrcp.pop %v266
  %vm268 = vcmask 7168
  %269 = vst.msk [vmem:[%s8] sm:$0xff] %vm268, %v267
  // Predicated region
  $region34: #{tpu_custom_call.1} parent=0 // pred_check
    _
  $region35: #{tpu_custom_call.1} parent=0 // pred_check_branch
    %271 = sbr.rel (0) target = $region37
  $region36: #{tpu_custom_call.1} parent=0 // pred_region
    _
  $region37: #{tpu_custom_call.1} parent=0 // pred_fallthru
    _
  // Predicated region
  $region38: #{tpu_custom_call.1} parent=0 // pred_check
    _
  $region39: #{tpu_custom_call.1} parent=0 // pred_check_branch
    %273 = sbr.rel (0) target = $region41
  $region40: #{tpu_custom_call.1} parent=0 // pred_region
    _
  $region41: #{tpu_custom_call.1} parent=0 // pred_fallthru
    _

</llo_original>
